<compile_context>
chip_gen: v6e
topology: v6e:2x2x1
jax: 0.10.0
libtpu: 0.0.40
codegen_flags: <defaults>
</compile_context>

<pallas_src>
import jax
import jax.numpy as jnp
from jax.experimental import pallas as pl
from jax.experimental.pallas import tpu as pltpu

_SUB = 8     # sublane quantum (second-to-last block dim)
_LANE = 128  # lane quantum (last block dim)


def _actnorm_kernel(x_ref, loc_ref, scale_ref, o_ref):
    # Single fused read -> VPU -> single store; loc/scale broadcast over the tile.
    o_ref[...] = scale_ref[...] * (x_ref[...] + loc_ref[...])


def _choose_block(rows, lanes, itemsize, target_bytes=2 * 1024 * 1024):
    """Pick an (8,128)-legal, lane-dense block of roughly `target_bytes`."""
    # Lane (last) dim: must be a multiple of 128 or the full extent.
    min_rows = rows if rows % _SUB != 0 else _SUB
    if lanes % _LANE != 0:
        lane_block = lanes
    else:
        budget = max(_LANE, target_bytes // (itemsize * min_rows))
        lane_block = max(_LANE, min(lanes, (budget // _LANE) * _LANE))
    # Row (second-to-last) dim: multiple of 8 or the full extent.
    if rows % _SUB != 0:
        row_block = rows
    else:
        budget = max(_SUB, target_bytes // (itemsize * lane_block))
        row_block = max(_SUB, min(rows, (budget // _SUB) * _SUB))
    return row_block, lane_block


def _actnorm_rows(x2, loc_rows, scale_rows):
    """x2: [R, L] lane-dense; loc_rows/scale_rows: [R, 1] per-row params."""
    rows, lanes = x2.shape
    rb, lb = _choose_block(rows, lanes, x2.dtype.itemsize)
    grid = (pl.cdiv(rows, rb), pl.cdiv(lanes, lb))
    return pl.pallas_call(
        _actnorm_kernel,
        out_shape=jax.ShapeDtypeStruct((rows, lanes), x2.dtype),
        grid=grid,
        in_specs=[
            pl.BlockSpec((rb, lb), lambda i, j: (i, j)),
            pl.BlockSpec((rb, 1), lambda i, j: (i, 0)),
            pl.BlockSpec((rb, 1), lambda i, j: (i, 0)),
        ],
        out_specs=pl.BlockSpec((rb, lb), lambda i, j: (i, j)),
        compiler_params=pltpu.CompilerParams(
            dimension_semantics=("parallel", "parallel"),
        ),
    )(x2, loc_rows, scale_rows)


def _actnorm_lanes(x2, loc_lanes, scale_lanes):
    """x2: [B, C] lane-dense; loc_lanes/scale_lanes: [1, C] per-lane params."""
    rows, lanes = x2.shape
    rb, lb = _choose_block(rows, lanes, x2.dtype.itemsize)
    grid = (pl.cdiv(rows, rb), pl.cdiv(lanes, lb))
    return pl.pallas_call(
        _actnorm_kernel,
        out_shape=jax.ShapeDtypeStruct((rows, lanes), x2.dtype),
        grid=grid,
        in_specs=[
            pl.BlockSpec((rb, lb), lambda i, j: (i, j)),
            pl.BlockSpec((1, lb), lambda i, j: (0, j)),
            pl.BlockSpec((1, lb), lambda i, j: (0, j)),
        ],
        out_specs=pl.BlockSpec((rb, lb), lambda i, j: (i, j)),
        compiler_params=pltpu.CompilerParams(
            dimension_semantics=("parallel", "parallel"),
        ),
    )(x2, loc_lanes, scale_lanes)


def actnorm_forward(x, loc, scale, logdet=False):
    """ActNorm forward: h = scale * (x + loc), broadcasting over channel.

    x:     [B, C, H, W]  (or [B, C], which is squeezed back like PyTorch)
    loc:   [1, C, 1, 1]
    scale: [1, C, 1, 1]
    """
    C = loc.shape[1]
    if x.ndim == 2:
        # Squeeze path: lane-dense [B, C] view with per-lane parameters.
        B = x.shape[0]
        height = width = 1
        loc_l = loc.reshape(1, C).astype(x.dtype)
        scale_l = scale.reshape(1, C).astype(x.dtype)
        h = _actnorm_lanes(x, loc_l, scale_l)
    else:
        B, Cx, H, W = x.shape
        height, width = H, W
        # Free view for contiguous NCHW: lane-dense [B*C, H*W] slab.
        x2 = x.reshape(B * Cx, H * W)
        loc_r = (
            jnp.broadcast_to(loc.reshape(1, Cx), (B, Cx))
            .reshape(B * Cx, 1)
            .astype(x.dtype)
        )
        scale_r = (
            jnp.broadcast_to(scale.reshape(1, Cx), (B, Cx))
            .reshape(B * Cx, 1)
            .astype(x.dtype)
        )
        h = _actnorm_rows(x2, loc_r, scale_r).reshape(B, Cx, H, W)

    if logdet:
        # Parameter-only reduction (no dependence on x values) -> plain JAX.
        # Accumulate in float32 regardless of input dtype, then cast back.
        log_abs = jnp.log(jnp.abs(scale.astype(jnp.float32)))
        ld = (height * width) * jnp.sum(log_abs)
        ld = (ld * jnp.ones((B,), dtype=jnp.float32)).astype(x.dtype)
        return h, ld
    return h


# TODO(synk): the training-time data-dependent initialize() (one-shot mean/std
# capture) and the reverse() path are not part of the eval forward and are not
# implemented here.


if __name__ == "__main__":
    key = jax.random.PRNGKey(0)
    kx, kl, ks, kx2 = jax.random.split(key, 4)

    B, C, H, W = 2, 4, 16, 16
    x = jax.random.normal(kx, (B, C, H, W), dtype=jnp.float32)

    # Deterministic, nontrivial parameter values (shapes from __init__:
    # loc = zeros(1, C, 1, 1), scale = ones(1, C, 1, 1)).
    loc = 0.1 * jax.random.normal(kl, (1, C, 1, 1), dtype=jnp.float32)
    scale = 1.0 + 0.05 * jax.random.normal(ks, (1, C, 1, 1), dtype=jnp.float32)

    # logdet=False path (default module config)
    h = actnorm_forward(x, loc, scale, logdet=False)
    h = jax.block_until_ready(h)
    ref = scale * (x + loc)
    assert h.shape == ref.shape
    assert jnp.allclose(h, ref, atol=1e-6, rtol=1e-6), "mismatch vs reference"

    # logdet=True path
    h2, ld = actnorm_forward(x, loc, scale, logdet=True)
    h2 = jax.block_until_ready(h2)
    ld = jax.block_until_ready(ld)
    ref_ld = H * W * jnp.sum(jnp.log(jnp.abs(scale))) * jnp.ones((B,), jnp.float32)
    assert jnp.allclose(h2, ref, atol=1e-6, rtol=1e-6)
    assert jnp.allclose(ld, ref_ld, atol=1e-5, rtol=1e-5)

    # 2D (squeeze) path: [B, C]
    x2d = jax.random.normal(kx2, (B, C), dtype=jnp.float32)
    h3 = actnorm_forward(x2d, loc, scale, logdet=False)
    h3 = jax.block_until_ready(h3)
    ref3 = (scale * (x2d[:, :, None, None] + loc))[:, :, 0, 0]
    assert h3.shape == (B, C)
    assert jnp.allclose(h3, ref3, atol=1e-6, rtol=1e-6)

    print("KERNEL_OK")
</pallas_src>

<mosaic_0001>
module attributes {stable_mosaic.version = 11 : i64} {
  func.func @_actnorm_kernel(%arg0: i32, %arg1: i32, %arg2: memref<8x256xf32, #tpu.memory_space<vmem>>, %arg3: memref<8x1xf32, #tpu.memory_space<vmem>>, %arg4: memref<8x1xf32, #tpu.memory_space<vmem>>, %arg5: memref<8x256xf32, #tpu.memory_space<vmem>>) attributes {dimension_semantics = [#tpu.dimension_semantics<parallel>, #tpu.dimension_semantics<parallel>], iteration_bounds = array<i64: 1, 1>, scalar_prefetch = 0 : i64, scratch_operands = 0 : i64, tpu.core_type = #tpu.core_type<tc>, window_params = [{transform_indices = @transform_0, window_bounds = array<i64: 8, 256>}, {transform_indices = @transform_1, window_bounds = array<i64: 8, 1>}, {transform_indices = @transform_2, window_bounds = array<i64: 8, 1>}, {transform_indices = @transform_3, window_bounds = array<i64: 8, 256>}]} {
    %c0 = arith.constant 0 : index
    %c0_0 = arith.constant 0 : index
    %0 = vector.load %arg4[%c0, %c0_0] : memref<8x1xf32, #tpu.memory_space<vmem>>, vector<8x1xf32>
    %c0_1 = arith.constant 0 : index
    %c0_2 = arith.constant 0 : index
    %1 = vector.load %arg2[%c0_1, %c0_2] : memref<8x256xf32, #tpu.memory_space<vmem>>, vector<8x256xf32>
    %c0_3 = arith.constant 0 : index
    %c0_4 = arith.constant 0 : index
    %2 = vector.load %arg3[%c0_3, %c0_4] : memref<8x1xf32, #tpu.memory_space<vmem>>, vector<8x1xf32>
    %3 = vector.broadcast %2 : vector<8x1xf32> to vector<8x256xf32>
    %4 = arith.addf %1, %3 : vector<8x256xf32>
    %5 = vector.broadcast %0 : vector<8x1xf32> to vector<8x256xf32>
    %6 = arith.mulf %5, %4 : vector<8x256xf32>
    %c0_5 = arith.constant 0 : index
    %c0_6 = arith.constant 0 : index
    %7 = vector.load %arg5[%c0_5, %c0_6] : memref<8x256xf32, #tpu.memory_space<vmem>>, vector<8x256xf32>
    tpu.vector_store %arg5[%c0_5, %c0_6], %6 {strides = array<i32>} : memref<8x256xf32, #tpu.memory_space<vmem>>, vector<8x256xf32>,
    return
  }
  func.func @transform_0(%arg0: i32, %arg1: i32) -> (i32, i32) {
    %c0_i32 = arith.constant 0 : i32
    return %arg0, %arg1 : i32, i32
  }
  func.func @transform_1(%arg0: i32, %arg1: i32) -> (i32, i32) {
    %c0_i32 = arith.constant 0 : i32
    %c0_i32_0 = arith.constant 0 : i32
    return %arg0, %c0_i32 : i32, i32
  }
  func.func @transform_2(%arg0: i32, %arg1: i32) -> (i32, i32) {
    %c0_i32 = arith.constant 0 : i32
    %c0_i32_0 = arith.constant 0 : i32
    return %arg0, %c0_i32 : i32, i32
  }
  func.func @transform_3(%arg0: i32, %arg1: i32) -> (i32, i32) {
    %c0_i32 = arith.constant 0 : i32
    return %arg0, %arg1 : i32, i32
  }
}

</mosaic_0001>

<llo_original>
// kernel: tpu_custom_call.1
$region0: #{tpu_custom_call.1}
  #allocation0 [shape = 'u32[]', space=smem, size = 0x4, offset = 0x4, fixed_abs, tag = 'smem constant byte address 0x4 - core index']
  #allocation1 [shape = 'u32[144,128]{1,0:T(1,128)}', space=vmem, size = 0x12000, scoped, tag = 'internal scratch']
  %s0 = inlined_call_operand.vmem [shape: f32[8,256], index: 0, kind: input, shape index: {}]
  %s1 = inlined_call_operand.vmem [shape: f32[8,1], index: 1, kind: input, shape index: {}]
  %s2 = inlined_call_operand.vmem [shape: f32[8,1], index: 2, kind: input, shape index: {}]
  %s3 = inlined_call_operand.hbm [shape: f32[8,256], index: 3, kind: output, shape index: {}]
  %s4 = sld [smem:[#allocation0]]
  $region22: #{tpu_custom_call.1} parent=0
    _
  %s6 = ssub.s32 1, %s4
  %s7 = scalar_select 0, %s6, %s4
  $region1: #{tpu_custom_call.1} parent=0
    #allocation2 [shape = 'u8[8192]{0}', space=vmem, size = 0x2000, scoped, tag = 'output window, operand 0, single buffered']
    #allocation3 [shape = 's32[1]{0}', space=sflag, size = 0x4, scoped, tag = 'scoped memory for tpu_custom_call.1']
    %8 = vsyncpa [#allocation3], 0
    // Predicated region
    $region2: #{tpu_custom_call.1} parent=1 // pred_check
      _
    $region3: #{tpu_custom_call.1} parent=1 // pred_check_branch
      %10 = sbr.rel (0) target = $region5
    $region4: #{tpu_custom_call.1} parent=1 // pred_region
      _
    $region5: #{tpu_custom_call.1} parent=1 // pred_fallthru
      _
    // Predicated region
    $region6: #{tpu_custom_call.1} parent=1 // pred_check
      _
    $region7: #{tpu_custom_call.1} parent=1 // pred_check_branch
      %12 = sbr.rel (0) target = $region9
    $region8: #{tpu_custom_call.1} parent=1 // pred_region
      _
    $region9: #{tpu_custom_call.1} parent=1 // pred_fallthru
      _
    // Predicated region
    $region10: #{tpu_custom_call.1} parent=1 // pred_check
      _
    $region11: #{tpu_custom_call.1} parent=1 // pred_check_branch
      %14 = sbr.rel (0) target = $region13
    $region12: #{tpu_custom_call.1} parent=1 // pred_region
      _
    $region13: #{tpu_custom_call.1} parent=1 // pred_fallthru
      _
    %v15 = vld [vmem:[%s2] sm:$0xff]
    %v16 = vld [vmem:[%s0] sm:$0xff]
    %v17 = vld [vmem:[%s0 + $0x8] sm:$0xff]
    %v18 = vld [vmem:[%s1] sm:$0xff]
    %20 = vset.pattern.permute.xlu0 0
    %21 = vperm.xlu0 %20, %v18
    %v22 = vpop.permute.xlu0 %21
    %v24 = vadd.f32 %v16, %v22
    %v25 = vadd.f32 %v17, %v22
    %27 = vset.pattern.permute.xlu0 0
    %28 = vperm.xlu0 %27, %v15
    %v29 = vpop.permute.xlu0 %28
    %v31 = vmul.f32 %v29, %v24
    %v32 = vmul.f32 %v29, %v25
    %33 = vst [vmem:[#allocation2] sm:$0xff] %v31
    %34 = vst [vmem:[#allocation2 + $0x8] sm:$0xff] %v32
    // Predicated region
    $region14: #{tpu_custom_call.1} parent=1 // pred_check
      _
    $region15: #{tpu_custom_call.1} parent=1 // pred_check_branch
      %36 = sbr.rel (0) target = $region17
    $region16: #{tpu_custom_call.1} parent=1 // pred_region
      %s38 = ssub.s32 256, 256
      %39 = vsyncadd [#allocation3], %s38
      %s41 = sshll.u32 [#allocation2], 4
      %s42 = int_to_ptr.vmem [resolvable:$true] %s41
      %44 = dma.vmem_to_hbm [thread:$0]  %s42, 256, %s3, [#allocation3]
    $region17: #{tpu_custom_call.1} parent=1 // pred_fallthru
      _
    // Predicated region
    $region18: #{tpu_custom_call.1} parent=1 // pred_check
      _
    $region19: #{tpu_custom_call.1} parent=1 // pred_check_branch
      %46 = sbr.rel (0) target = $region21
    $region20: #{tpu_custom_call.1} parent=1 // pred_region
      %47 = dma.done [#allocation3], 256
    $region21: #{tpu_custom_call.1} parent=1 // pred_fallthru
      _
    %48 = vsyncpa [#allocation3], 1

</llo_original>
